<compile_context>
chip_gen: v7x
topology: tpu7x:2x2x1
jax: 0.10.0
libtpu: 0.0.40
codegen_flags: <defaults>
</compile_context>

<pallas_src>
import jax
import jax.numpy as jnp
from jax.experimental import pallas as pl
from jax.experimental.pallas import tpu as pltpu

_EPS = 1e-5


# ----------------------------------------------------------------------------
# Kernels: one grid step computes a (B, tn) slab of output features.
# p_ref rows: 0=bias, 1=gamma, 2=beta, 3=alpha (broadcast), 4..7=padding.
# ----------------------------------------------------------------------------
def _layer1_kernel(x_ref, w_ref, p_ref, h_ref):
    # MXU: bf16 operands, f32 accumulate.
    y = jnp.dot(x_ref[...], w_ref[...], preferred_element_type=jnp.float32)
    y = y + p_ref[0:1, :]                                   # linear bias
    # BatchNorm1d, training-mode batch stats (biased variance), f32,
    # folded into a single per-feature scale/shift.
    mean = jnp.mean(y, axis=0, keepdims=True)
    diff = y - mean
    var = jnp.mean(diff * diff, axis=0, keepdims=True)
    scale = p_ref[1:2, :] * jax.lax.rsqrt(var + _EPS)       # gamma / sqrt(var+eps)
    z = diff * scale + p_ref[2:3, :]                        # + beta
    # PReLU (shared alpha, broadcast along features in row 3).
    z = jnp.where(z >= 0, z, p_ref[3:4, :] * z)
    h_ref[...] = z.astype(h_ref.dtype)


def _layer2_kernel(h_ref, w_ref, p_ref, xres_ref, o_ref):
    y = jnp.dot(h_ref[...], w_ref[...], preferred_element_type=jnp.float32)
    y = y + p_ref[0:1, :]
    mean = jnp.mean(y, axis=0, keepdims=True)
    diff = y - mean
    var = jnp.mean(diff * diff, axis=0, keepdims=True)
    scale = p_ref[1:2, :] * jax.lax.rsqrt(var + _EPS)
    z = diff * scale + p_ref[2:3, :]
    z = jnp.where(z >= 0, z, p_ref[3:4, :] * z)
    # Residual skip in f32.
    o_ref[...] = (xres_ref[...].astype(jnp.float32) + z).astype(o_ref.dtype)


# ----------------------------------------------------------------------------
# Tiling / VMEM accounting
# ----------------------------------------------------------------------------
def _vmem_estimate(B, D, tn):
    x_res = 2 * B * D * 2            # resident bf16 activations (dbl-buffer alloc)
    wt = 2 * D * tn * 2              # double-buffered bf16 weight tile
    res = 2 * B * tn * 4             # residual f32 x tile (layer 2)
    out = 2 * B * tn * 4             # double-buffered output tile
    pkd = 2 * 8 * tn * 4             # packed per-feature params
    return x_res + wt + res + out + pkd


def _pick_tile(B, D, target=512, budget=40 << 20):
    """Largest multiple of 128 that divides D (capped at `target`) whose
    estimated VMEM footprint fits `budget`; falls back to the smallest."""
    if D % 128 != 0:
        return D
    cands = [t for t in range(128, min(target, D) + 1, 128) if D % t == 0]
    if not cands:
        return D
    for t in sorted(cands, reverse=True):
        if _vmem_estimate(B, D, t) <= budget:
            return t
    return cands[0]


def _vmem_limit_bytes(B, D, tn):
    est = _vmem_estimate(B, D, tn) + (4 << 20)
    return int(min(max(est, 8 << 20), 48 << 20))


# ----------------------------------------------------------------------------
# Wrapper
# ----------------------------------------------------------------------------
def resnet_block(x, prepared, block_n=None):
    """x: (B, D) float32.  prepared: dict from prepare_params()."""
    B, D = x.shape
    tn = _pick_tile(B, D) if block_n is None else block_n
    assert D % tn == 0, "block_n must divide the feature dim"
    grid = (D // tn,)

    cparams = pltpu.CompilerParams(
        dimension_semantics=("parallel",),
        vmem_limit_bytes=_vmem_limit_bytes(B, D, tn),
    )

    x_bf = x.astype(jnp.bfloat16)  # MXU operand; residual uses the f32 x below.

    # Layer 1: h = PReLU(BN(x @ W1 + b1)); stored bf16 (only feeds the next MXU op).
    h = pl.pallas_call(
        _layer1_kernel,
        out_shape=jax.ShapeDtypeStruct((B, D), jnp.bfloat16),
        grid=grid,
        in_specs=[
            pl.BlockSpec((B, D), lambda j: (0, 0)),    # x: full batch, resident
            pl.BlockSpec((D, tn), lambda j: (0, j)),   # W1 tile: pipelined DMA
            pl.BlockSpec((8, tn), lambda j: (0, j)),   # packed bias/gamma/beta/alpha
        ],
        out_specs=pl.BlockSpec((B, tn), lambda j: (0, j)),
        compiler_params=cparams,
    )(x_bf, prepared["w1t"], prepared["p1"])

    # Layer 2 + residual: out = x + PReLU(BN(h @ W2 + b2))
    out = pl.pallas_call(
        _layer2_kernel,
        out_shape=jax.ShapeDtypeStruct((B, D), x.dtype),
        grid=grid,
        in_specs=[
            pl.BlockSpec((B, D), lambda j: (0, 0)),    # h: full batch, resident
            pl.BlockSpec((D, tn), lambda j: (0, j)),   # W2 tile
            pl.BlockSpec((8, tn), lambda j: (0, j)),   # packed params
            pl.BlockSpec((B, tn), lambda j: (0, j)),   # residual x tile (f32)
        ],
        out_specs=pl.BlockSpec((B, tn), lambda j: (0, j)),
        compiler_params=cparams,
    )(h, prepared["w2t"], prepared["p2"], x)

    return out


# ----------------------------------------------------------------------------
# Parameter init (torch-style shapes/scales) and one-time kernel preparation.
# ----------------------------------------------------------------------------
def init_params(key, dim):
    ks = jax.random.split(key, 4)
    bound = 1.0 / jnp.sqrt(dim)
    return {
        "w1": jax.random.uniform(ks[0], (dim, dim), jnp.float32, -bound, bound),
        "b1": jax.random.uniform(ks[1], (dim,), jnp.float32, -bound, bound),
        "g1": jnp.ones((dim,), jnp.float32),
        "be1": jnp.zeros((dim,), jnp.float32),
        "a1": jnp.array([0.25], jnp.float32),
        "w2": jax.random.uniform(ks[2], (dim, dim), jnp.float32, -bound, bound),
        "b2": jax.random.uniform(ks[3], (dim,), jnp.float32, -bound, bound),
        "g2": jnp.ones((dim,), jnp.float32),
        "be2": jnp.zeros((dim,), jnp.float32),
        "a2": jnp.array([0.25], jnp.float32),
    }


def prepare_params(p):
    """One-time: pre-transpose weights to (in, out) bf16, pack per-feature vecs."""
    D = p["w1"].shape[0]

    def pack(b, g, be, a):
        rows = jnp.stack([b, g, be, jnp.full((D,), a[0], jnp.float32)], axis=0)  # (4, D)
        return jnp.concatenate([rows, jnp.zeros((4, D), jnp.float32)], axis=0)   # (8, D)

    return {
        "w1t": p["w1"].T.astype(jnp.bfloat16),
        "p1": pack(p["b1"], p["g1"], p["be1"], p["a1"]),
        "w2t": p["w2"].T.astype(jnp.bfloat16),
        "p2": pack(p["b2"], p["g2"], p["be2"], p["a2"]),
    }


# ----------------------------------------------------------------------------
# Pure-JAX reference with the SAME mixed-precision policy (bf16 MXU operands,
# f32 accumulate / BN / PReLU / residual) for a tight numerical check.
# ----------------------------------------------------------------------------
def _reference(x, p):
    def layer(h_bf16, w, b, g, be, a):
        y = jnp.dot(h_bf16, w.T.astype(jnp.bfloat16),
                    preferred_element_type=jnp.float32) + b
        mean = jnp.mean(y, axis=0, keepdims=True)
        diff = y - mean
        var = jnp.mean(diff * diff, axis=0, keepdims=True)
        z = g * diff * jax.lax.rsqrt(var + _EPS) + be
        return jnp.where(z >= 0, z, a * z)

    h1 = layer(x.astype(jnp.bfloat16), p["w1"], p["b1"], p["g1"], p["be1"], p["a1"])
    h2 = layer(h1.astype(jnp.bfloat16), p["w2"], p["b2"], p["g2"], p["be2"], p["a2"])
    return x + h2


if __name__ == "__main__":
    B, D = 16, 256              # small but lane-dense; block_n=128 -> grid of 2 per layer
    key = jax.random.PRNGKey(0)
    kx, kp = jax.random.split(key)
    x = jax.random.normal(kx, (B, D), jnp.float32)
    params = init_params(kp, D)
    prepared = prepare_params(params)

    out = resnet_block(x, prepared, block_n=128)
    out = jax.block_until_ready(out)

    ref = _reference(x, params)
    assert out.shape == (B, D)
    assert jnp.allclose(out, ref, atol=2e-3, rtol=2e-3), "mismatch vs reference"
    print("KERNEL_OK")
</pallas_src>

<mosaic_0001>
module attributes {stable_mosaic.version = 11 : i64} {
  func.func @_layer1_kernel(%arg0: i32, %arg1: memref<16x256xbf16, #tpu.memory_space<vmem>>, %arg2: memref<256x128xbf16, #tpu.memory_space<vmem>>, %arg3: memref<8x128xf32, #tpu.memory_space<vmem>>, %arg4: memref<16x128xbf16, #tpu.memory_space<vmem>>) attributes {dimension_semantics = [#tpu.dimension_semantics<parallel>], iteration_bounds = array<i64: 2>, scalar_prefetch = 0 : i64, scratch_operands = 0 : i64, tpu.core_type = #tpu.core_type<tc>, window_params = [{pipeline_mode = #tpu.pipeline_mode<synchronous>, transform_indices = @transform_0, window_bounds = array<i64: 16, 256>}, {transform_indices = @transform_1, window_bounds = array<i64: 256, 128>}, {transform_indices = @transform_2, window_bounds = array<i64: 8, 128>}, {transform_indices = @transform_3, window_bounds = array<i64: 16, 128>}]} {
    %c0 = arith.constant 0 : index
    %c0_0 = arith.constant 0 : index
    %0 = vector.load %arg1[%c0, %c0_0] : memref<16x256xbf16, #tpu.memory_space<vmem>>, vector<16x256xbf16>
    %c0_1 = arith.constant 0 : index
    %c0_2 = arith.constant 0 : index
    %1 = vector.load %arg2[%c0_1, %c0_2] : memref<256x128xbf16, #tpu.memory_space<vmem>>, vector<256x128xbf16>
    %cst = arith.constant dense<0.000000e+00> : vector<16x128xf32>
    %2 = tpu.matmul %0, %1, %cst {dimension_numbers = #tpu.dot_dimension_numbers<[1], [0], [0], [1], [0, 0, 1, 1], [], []>} : vector<16x256xbf16>, vector<256x128xbf16>, vector<16x128xf32> -> vector<16x128xf32>
    %c0_3 = arith.constant 0 : index
    %c0_4 = arith.constant 0 : index
    %3 = vector.load %arg3[%c0_3, %c0_4] : memref<8x128xf32, #tpu.memory_space<vmem>>, vector<1x128xf32>
    %4 = vector.broadcast %3 : vector<1x128xf32> to vector<16x128xf32>
    %5 = arith.addf %2, %4 : vector<16x128xf32>
    %cst_5 = arith.constant dense<0.000000e+00> : vector<128xf32>
    %6 = vector.multi_reduction <add>, %5, %cst_5 [0] : vector<16x128xf32> to vector<128xf32>
    %7 = vector.shape_cast %6 : vector<128xf32> to vector<1x128xf32>
    %cst_6 = arith.constant 1.600000e+01 : f32
    %8 = vector.broadcast %cst_6 : f32 to vector<1x128xf32>
    %9 = arith.divf %7, %8 : vector<1x128xf32>
    %10 = vector.broadcast %9 : vector<1x128xf32> to vector<16x128xf32>
    %11 = arith.subf %5, %10 : vector<16x128xf32>
    %12 = arith.mulf %11, %11 : vector<16x128xf32>
    %cst_7 = arith.constant dense<0.000000e+00> : vector<128xf32>
    %13 = vector.multi_reduction <add>, %12, %cst_7 [0] : vector<16x128xf32> to vector<128xf32>
    %14 = vector.shape_cast %13 : vector<128xf32> to vector<1x128xf32>
    %cst_8 = arith.constant 1.600000e+01 : f32
    %15 = vector.broadcast %cst_8 : f32 to vector<1x128xf32>
    %16 = arith.divf %14, %15 : vector<1x128xf32>
    %c1 = arith.constant 1 : index
    %c0_9 = arith.constant 0 : index
    %17 = vector.load %arg3[%c1, %c0_9] : memref<8x128xf32, #tpu.memory_space<vmem>>, vector<1x128xf32>
    %cst_10 = arith.constant 9.99999974E-6 : f32
    %18 = vector.broadcast %cst_10 : f32 to vector<1x128xf32>
    %19 = arith.addf %16, %18 : vector<1x128xf32>
    %20 = math.rsqrt %19 : vector<1x128xf32>
    %21 = arith.mulf %17, %20 : vector<1x128xf32>
    %22 = vector.broadcast %21 : vector<1x128xf32> to vector<16x128xf32>
    %23 = arith.mulf %11, %22 : vector<16x128xf32>
    %c2 = arith.constant 2 : index
    %c0_11 = arith.constant 0 : index
    %24 = vector.load %arg3[%c2, %c0_11] : memref<8x128xf32, #tpu.memory_space<vmem>>, vector<1x128xf32>
    %25 = vector.broadcast %24 : vector<1x128xf32> to vector<16x128xf32>
    %26 = arith.addf %23, %25 : vector<16x128xf32>
    %cst_12 = arith.constant 0.000000e+00 : f32
    %27 = vector.broadcast %cst_12 : f32 to vector<16x128xf32>
    %28 = arith.cmpf oge, %26, %27 : vector<16x128xf32>
    %c3 = arith.constant 3 : index
    %c0_13 = arith.constant 0 : index
    %29 = vector.load %arg3[%c3, %c0_13] : memref<8x128xf32, #tpu.memory_space<vmem>>, vector<1x128xf32>
    %30 = vector.broadcast %29 : vector<1x128xf32> to vector<16x128xf32>
    %31 = arith.mulf %30, %26 : vector<16x128xf32>
    %32 = arith.select %28, %26, %31 : vector<16x128xi1>, vector<16x128xf32>
    %33 = arith.truncf %32 : vector<16x128xf32> to vector<16x128xbf16>
    %c0_14 = arith.constant 0 : index
    %c0_15 = arith.constant 0 : index
    %34 = vector.load %arg4[%c0_14, %c0_15] : memref<16x128xbf16, #tpu.memory_space<vmem>>, vector<16x128xbf16>
    tpu.vector_store %arg4[%c0_14, %c0_15], %33 {strides = array<i32>} : memref<16x128xbf16, #tpu.memory_space<vmem>>, vector<16x128xbf16>,
    return
  }
  func.func @transform_0(%arg0: i32) -> (i32, i32) {
    %c0_i32 = arith.constant 0 : i32
    %c0_i32_0 = arith.constant 0 : i32
    %c0_i32_1 = arith.constant 0 : i32
    return %c0_i32, %c0_i32_0 : i32, i32
  }
  func.func @transform_1(%arg0: i32) -> (i32, i32) {
    %c0_i32 = arith.constant 0 : i32
    %c0_i32_0 = arith.constant 0 : i32
    return %c0_i32, %arg0 : i32, i32
  }
  func.func @transform_2(%arg0: i32) -> (i32, i32) {
    %c0_i32 = arith.constant 0 : i32
    %c0_i32_0 = arith.constant 0 : i32
    return %c0_i32, %arg0 : i32, i32
  }
  func.func @transform_3(%arg0: i32) -> (i32, i32) {
    %c0_i32 = arith.constant 0 : i32
    %c0_i32_0 = arith.constant 0 : i32
    return %c0_i32, %arg0 : i32, i32
  }
}

</mosaic_0001>

<llo_original>
// kernel: tpu_custom_call.1
$region0: #{tpu_custom_call.1}
  #allocation0 [shape = 'u32[]', space=smem, size = 0x4, offset = 0x4, fixed_abs, tag = 'smem constant byte address 0x4 - core index']
  #allocation1 [shape = 'u32[144,128]{1,0:T(1,128)}', space=vmem, size = 0x12000, scoped, tag = 'internal scratch']
  %s0 = inlined_call_operand.hbm [shape: bf16[16,256], index: 0, kind: input, shape index: {}]
  %s1 = inlined_call_operand.hbm [shape: bf16[256,256], index: 1, kind: input, shape index: {}]
  %s2 = inlined_call_operand.hbm [shape: f32[8,256], index: 2, kind: input, shape index: {}]
  %s3 = inlined_call_operand.hbm [shape: bf16[16,256], index: 3, kind: output, shape index: {}]
  %s4 = sld [smem:[#allocation0]]
  $region57: #{tpu_custom_call.1} parent=0
    _
  %s6 = ssub.s32 1, %s4
  %s7 = scalar_select 0, %s6, %s4
  $region1: #{tpu_custom_call.1} parent=0
    #allocation2 [shape = 'u8[8192]{0}', space=vmem, size = 0x2000, scoped, tag = 'input window, operand 0, single buffered']
    #allocation3 [shape = 's32[2]{0}', space=sflag, size = 0x8, scoped, tag = 'scoped memory for tpu_custom_call.1']
    #allocation4 [shape = 's32[2]{0}', space=sflag, size = 0x8, scoped, tag = 'scoped memory for tpu_custom_call.1']
    #allocation5 [shape = 'u8[131072]{0}', space=vmem, size = 0x20000, scoped, tag = 'input window, operand 1']
    #allocation6 [shape = 's32[2]{0}', space=sflag, size = 0x8, scoped, tag = 'scoped memory for tpu_custom_call.1']
    #allocation7 [shape = 'u8[8192]{0}', space=vmem, size = 0x2000, scoped, tag = 'input window, operand 2']
    #allocation8 [shape = 'u8[8192]{0}', space=vmem, size = 0x2000, scoped, tag = 'output window, operand 0']
    %8 = vsyncpa [#allocation3], 0
    %9 = vsyncpa [#allocation6], 0
    %s10 = scalar_lea.sflag [#allocation6], 1
    %11 = vsyncpa %s10, 0
    %12 = vsyncpa [#allocation4], 0
    %s13 = scalar_lea.sflag [#allocation4], 1
    %14 = vsyncpa %s13, 0
    loop: start=0, step=1, limit=4
    $region2: #{tpu_custom_call.1} parent=1 // loop_pre_header
      _
    $region3: #{tpu_custom_call.1} parent=1 // loop_header
      %s16 = sphi 0, %s20
      %p17 = scmp.ge.s32.totalorder %s16, 4
      %s24 = sphi 0, %s24
      %s26 = sphi 0, %s24
      %s27 = sphi 0, %s26
      %s41 = sphi 0, %s27
      %s47 = sphi 0, %s49
      %s50 = sphi 0, %s47
      %s51 = sphi 0, %s50
      %s67 = sphi 0, %s51
      %s73 = sphi 0, %s75
      %s76 = sphi 0, %s73
      %s77 = sphi 0, %s76
      %s93 = sphi 0, %s77
      %s99 = sphi 0, %s101
      %s102 = sphi 0, %s99
      %s103 = sphi 0, %s102
      %s119 = sphi 0, %s103
    $region4: #{tpu_custom_call.1} parent=1 // loop_header_branch
      %19 = sbr.rel (%p17) target = $region8
    $region5: #{tpu_custom_call.1} parent=1 // loop_body
      %s21 = ssub.s32 %s16, 1
      %s22 = ssub.s32 %s16, 2
      %s23 = sadd.s32 %s16, 1
      %s25 = sadd.s32 %s24, 1
      %p28 = scmp.eq.s32.totalorder %s16, 1
      %p29 = scmp.ne.s32.totalorder %s24, %s26
      %p30 = scmp.eq.s32.totalorder %s16, 0
      %p31 = por %p29, %p30
      %p32 = scmp.ne.s32.totalorder %s24, %s26
      %p33 = scmp.eq.s32.totalorder %s21, 1
      %p34 = por %p32, %p33
      %p35 = scmp.ne.s32.totalorder %s26, %s27
      %p36 = scmp.eq.s32.totalorder %s21, 0
      %p37 = por %p35, %p36
      %p38 = scmp.ne.s32.totalorder %s26, %s27
      %p39 = scmp.eq.s32.totalorder %s22, 1
      %p40 = por %p38, %p39
      %p42 = scmp.ne.s32.totalorder %s27, %s41
      %p43 = scmp.eq.s32.totalorder %s22, 0
      %p44 = por %p42, %p43
      %s45 = ssub.s32 %s16, %s23
      %p46 = scmp.eq.s32.totalorder %s45, 0
      %s48 = sadd.s32 %s47, 1
      %s49 = scalar_select %p46, %s47, %s48
      %p52 = pneg %p46
      %p53 = scmp.eq.s32.totalorder %s16, 1
      %p54 = por %p52, %p53
      %p55 = scmp.ne.s32.totalorder %s47, %s50
      %p56 = scmp.eq.s32.totalorder %s16, 0
      %p57 = por %p55, %p56
      %p58 = scmp.ne.s32.totalorder %s47, %s50
      %p59 = scmp.eq.s32.totalorder %s21, 1
      %p60 = por %p58, %p59
      %p61 = scmp.ne.s32.totalorder %s50, %s51
      %p62 = scmp.eq.s32.totalorder %s21, 0
      %p63 = por %p61, %p62
      %p64 = scmp.ne.s32.totalorder %s50, %s51
      %p65 = scmp.eq.s32.totalorder %s22, 1
      %p66 = por %p64, %p65
      %p68 = scmp.ne.s32.totalorder %s51, %s67
      %p69 = scmp.eq.s32.totalorder %s22, 0
      %p70 = por %p68, %p69
      %s71 = ssub.s32 %s16, %s23
      %p72 = scmp.eq.s32.totalorder %s71, 0
      %s74 = sadd.s32 %s73, 1
      %s75 = scalar_select %p72, %s73, %s74
      %p78 = pneg %p72
      %p79 = scmp.eq.s32.totalorder %s16, 1
      %p80 = por %p78, %p79
      %p81 = scmp.ne.s32.totalorder %s73, %s76
      %p82 = scmp.eq.s32.totalorder %s16, 0
      %p83 = por %p81, %p82
      %p84 = scmp.ne.s32.totalorder %s73, %s76
      %p85 = scmp.eq.s32.totalorder %s21, 1
      %p86 = por %p84, %p85
      %p87 = scmp.ne.s32.totalorder %s76, %s77
      %p88 = scmp.eq.s32.totalorder %s21, 0
      %p89 = por %p87, %p88
      %p90 = scmp.ne.s32.totalorder %s76, %s77
      %p91 = scmp.eq.s32.totalorder %s22, 1
      %p92 = por %p90, %p91
      %p94 = scmp.ne.s32.totalorder %s77, %s93
      %p95 = scmp.eq.s32.totalorder %s22, 0
      %p96 = por %p94, %p95
      %s97 = ssub.s32 %s16, %s23
      %p98 = scmp.eq.s32.totalorder %s97, 0
      %s100 = sadd.s32 %s99, 1
      %s101 = scalar_select %p98, %s99, %s100
      %p104 = pneg %p98
      %p105 = scmp.eq.s32.totalorder %s16, 1
      %p106 = por %p104, %p105
      %p107 = scmp.ne.s32.totalorder %s99, %s102
      %p108 = scmp.eq.s32.totalorder %s16, 0
      %p109 = por %p107, %p108
      %p110 = scmp.ne.s32.totalorder %s99, %s102
      %p111 = scmp.eq.s32.totalorder %s21, 1
      %p112 = por %p110, %p111
      %p113 = scmp.ne.s32.totalorder %s102, %s103
      %p114 = scmp.eq.s32.totalorder %s21, 0
      %p115 = por %p113, %p114
      %p116 = scmp.ne.s32.totalorder %s102, %s103
      %p117 = scmp.eq.s32.totalorder %s22, 1
      %p118 = por %p116, %p117
      %p120 = scmp.ne.s32.totalorder %s103, %s119
      %p121 = scmp.eq.s32.totalorder %s22, 0
      %p122 = por %p120, %p121
      %p123 = scmp.le.s32.totalorder 1, %s16
      %p124 = scmp.lt.s32.totalorder %s16, 3
      %p125 = pnand %p123, %p124
      %p126 = pneg %p125
      // Predicated region
      $region9: #{tpu_custom_call.1} parent=5 // pred_check
        _
      $region10: #{tpu_custom_call.1} parent=5 // pred_check_branch
        %128 = sbr.rel (%p125) target = $region12
      $region11: #{tpu_custom_call.1} parent=5 // pred_region
        %s129 = ssub.s32 %s16, 1
        // Predicated region
        $region13: #{tpu_custom_call.1} parent=11 // pred_check
          %p130 = pneg %p37
        $region14: #{tpu_custom_call.1} parent=11 // pred_check_branch
          %132 = sbr.rel (%p130) target = $region16
        $region15: #{tpu_custom_call.1} parent=11 // pred_region
          %s134 = ssub.s32 256, 256
          %135 = vsyncadd [#allocation3], %s134
          %s136 = sshll.u32 [#allocation2], 4
          %s137 = int_to_ptr.vmem [resolvable:$true] %s136
          %142 = dma.hbm_to_vmem [thread:$0]  %s0, 256, %s137, [#allocation3], 128, 128, 8
        $region16: #{tpu_custom_call.1} parent=11 // pred_fallthru
          _
      $region12: #{tpu_custom_call.1} parent=5 // pred_fallthru
        _
      %p143 = scmp.lt.s32.totalorder %s16, 2
      // Predicated region
      $region17: #{tpu_custom_call.1} parent=5 // pred_check
        %p144 = pneg %p143
      $region18: #{tpu_custom_call.1} parent=5 // pred_check_branch
        %146 = sbr.rel (%p144) target = $region20
      $region19: #{tpu_custom_call.1} parent=5 // pred_region
        // Predicated region
        $region21: #{tpu_custom_call.1} parent=19 // pred_check
          %p147 = pneg %p57
        $region22: #{tpu_custom_call.1} parent=19 // pred_check_branch
          %149 = sbr.rel (%p147) target = $region24
        $region23: #{tpu_custom_call.1} parent=19 // pred_region
          %s150 = sand.u32 %s16, 1
          %s151 = scalar_lea.sflag [#allocation6], %s150
          %s152 = sand.u32 %s47, 1
          %s153 = smul.addr %s152, 128
          %s154 = scalar_lea.vmem [#allocation5], %s153
          %s156 = ssub.s32 2048, 2048
          %157 = vsyncadd %s151, %s156
          %s158 = smul.addr %s16, 64
          %s159 = scalar_lea.hbm %s1, %s158
          %s160 = sshll.u32 %s154, 4
          %s161 = int_to_ptr.vmem [resolvable:$true] %s160
          %166 = dma.hbm_to_vmem [thread:$0]  %s159, 2048, %s161, %s151, 128, 64, 4
        $region24: #{tpu_custom_call.1} parent=19 // pred_fallthru
          _
        // Predicated region
        $region25: #{tpu_custom_call.1} parent=19 // pred_check
          %p167 = pneg %p83
        $region26: #{tpu_custom_call.1} parent=19 // pred_check_branch
          %169 = sbr.rel (%p167) target = $region28
        $region27: #{tpu_custom_call.1} parent=19 // pred_region
          %s170 = sand.u32 %s16, 1
          %s171 = scalar_lea.sflag [#allocation6], %s170
          %s172 = sand.u32 %s73, 1
          %s173 = smul.addr %s172, 8
          %s174 = scalar_lea.vmem [#allocation7], %s173
          %s176 = ssub.s32 128, 128
          %177 = vsyncadd %s171, %s176
          %s178 = smul.addr %s16, 128
          %s179 = scalar_lea.hbm %s2, %s178
          %s181 = sshll.u32 %s174, 4
          %s182 = int_to_ptr.vmem [resolvable:$true] %s181
          %184 = dma.hbm_to_vmem [thread:$0]  %s179, 128, %s182, %s171
        $region28: #{tpu_custom_call.1} parent=19 // pred_fallthru
          _
      $region20: #{tpu_custom_call.1} parent=5 // pred_fallthru
        _
      %p185 = scmp.le.s32.totalorder 1, %s16
      %p186 = scmp.lt.s32.totalorder %s16, 3
      %p187 = pnand %p185, %p186
      %p188 = pneg %p187
      // Predicated region
      $region29: #{tpu_custom_call.1} parent=5 // pred_check
        _
      $region30: #{tpu_custom_call.1} parent=5 // pred_check_branch
        %190 = sbr.rel (%p187) target = $region32
      $region31: #{tpu_custom_call.1} parent=5 // pred_region
        %s191 = ssub.s32 %s16, 1
        // Predicated region
        $region33: #{tpu_custom_call.1} parent=31 // pred_check
          %p192 = pneg %p37
        $region34: #{tpu_custom_call.1} parent=31 // pred_check_branch
          %194 = sbr.rel (%p192) target = $region36
        $region35: #{tpu_custom_call.1} parent=31 // pred_region
          %195 = dma.done [#allocation3], 256
        $region36: #{tpu_custom_call.1} parent=31 // pred_fallthru
          _
        %s196 = sand.u32 %s21, 1
        %s197 = scalar_lea.sflag [#allocation6], %s196
        %s198 = sand.u32 %s50, 1
        %s199 = smul.addr %s198, 128
        %s200 = scalar_lea.vmem [#allocation5], %s199
        // Predicated region
        $region37: #{tpu_custom_call.1} parent=31 // pred_check
          %p201 = pneg %p63
        $region38: #{tpu_custom_call.1} parent=31 // pred_check_branch
          %203 = sbr.rel (%p201) target = $region40
        $region39: #{tpu_custom_call.1} parent=31 // pred_region
          %204 = dma.done %s197, 2048
        $region40: #{tpu_custom_call.1} parent=31 // pred_fallthru
          _
        %s205 = sand.u32 %s21, 1
        %s206 = scalar_lea.sflag [#allocation6], %s205
        %s207 = sand.u32 %s76, 1
        %s208 = smul.addr %s207, 8
        %s209 = scalar_lea.vmem [#allocation7], %s208
        // Predicated region
        $region41: #{tpu_custom_call.1} parent=31 // pred_check
          %p210 = pneg %p89
        $region42: #{tpu_custom_call.1} parent=31 // pred_check_branch
          %212 = sbr.rel (%p210) target = $region44
        $region43: #{tpu_custom_call.1} parent=31 // pred_region
          %213 = dma.done %s206, 128
        $region44: #{tpu_custom_call.1} parent=31 // pred_fallthru
          _
        %p214 = pneg %p37
        %p215 = pneg %p34
        %s216 = sand.u32 %s21, 1
        %s217 = scalar_lea.sflag [#allocation6], %s216
        %s218 = sand.u32 %s50, 1
        %s219 = smul.addr %s218, 128
        %s220 = scalar_lea.vmem [#allocation5], %s219
        %p221 = pneg %p63
        %p222 = pneg %p60
        %s223 = sand.u32 %s21, 1
        %s224 = scalar_lea.sflag [#allocation6], %s223
        %s225 = sand.u32 %s76, 1
        %s226 = smul.addr %s225, 8
        %s227 = scalar_lea.vmem [#allocation7], %s226
        %p228 = pneg %p89
        %p229 = pneg %p86
        %p230 = pneg %p115
        %p231 = pneg %p112
        %s232 = sand.u32 %s102, 1
        %s233 = scalar_lea.sflag [#allocation4], %s232
        %s234 = sand.u32 %s102, 1
        %s235 = smul.addr %s234, 8
        %s236 = scalar_lea.vmem [#allocation8], %s235
        %v238 = vld [vmem:[#allocation2] sm:$0xff]
        %v239 = vld [vmem:[#allocation2 + $0x8] sm:$0xff]
        %v240 = vld [vmem:[%s200] sm:$0xf]
        %v241 = vld [vmem:[%s200 + $0x4] sm:$0xf]
        %v242 = vld [vmem:[%s200 + $0x8] sm:$0xf]
        %v243 = vld [vmem:[%s200 + $0xc] sm:$0xf]
        %v244 = vld [vmem:[%s200 + $0x10] sm:$0xf]
        %v245 = vld [vmem:[%s200 + $0x14] sm:$0xf]
        %v246 = vld [vmem:[%s200 + $0x18] sm:$0xf]
        %v247 = vld [vmem:[%s200 + $0x1c] sm:$0xf]
        %v248 = vld [vmem:[%s200 + $0x20] sm:$0xf]
        %v249 = vld [vmem:[%s200 + $0x24] sm:$0xf]
        %v250 = vld [vmem:[%s200 + $0x28] sm:$0xf]
        %v251 = vld [vmem:[%s200 + $0x2c] sm:$0xf]
        %v252 = vld [vmem:[%s200 + $0x30] sm:$0xf]
        %v253 = vld [vmem:[%s200 + $0x34] sm:$0xf]
        %v254 = vld [vmem:[%s200 + $0x38] sm:$0xf]
        %v255 = vld [vmem:[%s200 + $0x3c] sm:$0xf]
        %v256 = vld [vmem:[%s200 + $0x40] sm:$0xf]
        %v257 = vld [vmem:[%s200 + $0x44] sm:$0xf]
        %v258 = vld [vmem:[%s200 + $0x48] sm:$0xf]
        %v259 = vld [vmem:[%s200 + $0x4c] sm:$0xf]
        %v260 = vld [vmem:[%s200 + $0x50] sm:$0xf]
        %v261 = vld [vmem:[%s200 + $0x54] sm:$0xf]
        %v262 = vld [vmem:[%s200 + $0x58] sm:$0xf]
        %v263 = vld [vmem:[%s200 + $0x5c] sm:$0xf]
        %v264 = vld [vmem:[%s200 + $0x60] sm:$0xf]
        %v265 = vld [vmem:[%s200 + $0x64] sm:$0xf]
        %v266 = vld [vmem:[%s200 + $0x68] sm:$0xf]
        %v267 = vld [vmem:[%s200 + $0x6c] sm:$0xf]
        %v268 = vld [vmem:[%s200 + $0x70] sm:$0xf]
        %v269 = vld [vmem:[%s200 + $0x74] sm:$0xf]
        %v270 = vld [vmem:[%s200 + $0x78] sm:$0xf]
        %v271 = vld [vmem:[%s200 + $0x7c] sm:$0xf]
        %v272 = vld [vmem:[%s209] sm:$0x1]
        %v273 = vlaneseq
        %v274 = vshrl.u32 %v273, 7
        %v275 = vsub.s32 0, %v274
        %v276 = vrot.slane %v272, %v275
        %v279 = vunpack.c.l.b16 %v238
        %v280 = vunpack.c.h.b16 %v238
        %v281 = vunpack.c.l.b16 %v239
        %v282 = vunpack.c.h.b16 %v239
        %v283 = vpack.c.b16 %v281, %v279
        %v284 = vpack.c.b16 %v282, %v280
        %v319 = vunpack.c.l.b16 %v240
        %v320 = vunpack.c.l.b16 %v241
        %v321 = vunpack.c.l.b16 %v242
        %v322 = vunpack.c.l.b16 %v243
        %v323 = vunpack.c.l.b16 %v244
        %v324 = vunpack.c.l.b16 %v245
        %v325 = vunpack.c.l.b16 %v246
        %v326 = vunpack.c.l.b16 %v247
        %v327 = vunpack.c.l.b16 %v248
        %v328 = vunpack.c.l.b16 %v249
        %v329 = vunpack.c.l.b16 %v250
        %v330 = vunpack.c.l.b16 %v251
        %v331 = vunpack.c.l.b16 %v252
        %v332 = vunpack.c.l.b16 %v253
        %v333 = vunpack.c.l.b16 %v254
        %v334 = vunpack.c.l.b16 %v255
        %v335 = vunpack.c.l.b16 %v256
        %v336 = vunpack.c.l.b16 %v257
        %v337 = vunpack.c.l.b16 %v258
        %v338 = vunpack.c.l.b16 %v259
        %v339 = vunpack.c.l.b16 %v260
        %v340 = vunpack.c.l.b16 %v261
        %v341 = vunpack.c.l.b16 %v262
        %v342 = vunpack.c.l.b16 %v263
        %v343 = vunpack.c.l.b16 %v264
        %v344 = vunpack.c.l.b16 %v265
        %v345 = vunpack.c.l.b16 %v266
        %v346 = vunpack.c.l.b16 %v267
        %v347 = vunpack.c.l.b16 %v268
        %v348 = vunpack.c.l.b16 %v269
        %v349 = vunpack.c.l.b16 %v270
        %v350 = vunpack.c.l.b16 %v271
        %v351 = vpack.c.b16 %v320, %v319
        %v352 = vpack.c.b16 %v322, %v321
        %v353 = vpack.c.b16 %v324, %v323
        %v354 = vpack.c.b16 %v326, %v325
        %v355 = vpack.c.b16 %v328, %v327
        %v356 = vpack.c.b16 %v330, %v329
        %v357 = vpack.c.b16 %v332, %v331
        %v358 = vpack.c.b16 %v334, %v333
        %v359 = vpack.c.b16 %v336, %v335
        %v360 = vpack.c.b16 %v338, %v337
        %v361 = vpack.c.b16 %v340, %v339
        %v362 = vpack.c.b16 %v342, %v341
        %v363 = vpack.c.b16 %v344, %v343
        %v364 = vpack.c.b16 %v346, %v345
        %v365 = vpack.c.b16 %v348, %v347
        %v366 = vpack.c.b16 %v350, %v349
        %383 = vmatprep.subr.bf16.mxu0 0
        %384 = vmatpush1.bf16.msra.mxu0 %v351
        %385 = vmatprep.subr.bf16.mxu0 0
        %386 = vmatpush1.bf16.msra.mxu0 %v352
        %387 = vmatprep.subr.bf16.mxu0 0
        %388 = vmatpush1.bf16.msra.mxu0 %v353
        %389 = vmatprep.subr.bf16.mxu0 0
        %390 = vmatpush1.bf16.msra.mxu0 %v354
        %391 = vmatprep.subr.bf16.mxu0 0
        %392 = vmatpush1.bf16.msra.mxu0 %v355
        %393 = vmatprep.subr.bf16.mxu0 0
        %394 = vmatpush1.bf16.msra.mxu0 %v356
        %395 = vmatprep.subr.bf16.mxu0 0
        %396 = vmatpush1.bf16.msra.mxu0 %v357
        %397 = vmatprep.subr.bf16.mxu0 0
        %398 = vmatpush1.bf16.msra.mxu0 %v358
        %399 = vmatprep.subr.bf16.mxu0 0
        %400 = vmatpush1.bf16.msra.mxu0 %v359
        %401 = vmatprep.subr.bf16.mxu0 0
        %402 = vmatpush1.bf16.msra.mxu0 %v360
        %403 = vmatprep.subr.bf16.mxu0 0
        %404 = vmatpush1.bf16.msra.mxu0 %v361
        %405 = vmatprep.subr.bf16.mxu0 0
        %406 = vmatpush1.bf16.msra.mxu0 %v362
        %407 = vmatprep.subr.bf16.mxu0 0
        %408 = vmatpush1.bf16.msra.mxu0 %v363
        %409 = vmatprep.subr.bf16.mxu0 0
        %410 = vmatpush1.bf16.msra.mxu0 %v364
        %411 = vmatprep.subr.bf16.mxu0 0
        %412 = vmatpush1.bf16.msra.mxu0 %v365
        %413 = vmatprep.subr.bf16.mxu0 0
        %414 = vmatpush1.bf16.msra.mxu0 %v366
        %415 = vmatprep.mubr.bf16.mxu0 %v284
        %416 = vmatmul.mubr.bf16.gmra.mrb[0].mxu0 %v283
        %v417 = vpop.f32.mrb[0].mxu0
        %v418 = vadd.f32 %v276, %v417
        %v419 = vpop.f32.mrb[0].mxu0
        %v420 = vpop.f32.mrb[0].mxu0
        %v421 = vadd.f32 %v276, %v420
        %v422 = vpop.f32.mrb[0].mxu0
        %423 = vdwg.mxu0
        %v424 = vadd.f32 %v418, %v421
        %v425 = vrot.slane %v424, 4
        %v426 = vadd.f32 %v424, %v425
        %v427 = vrot.slane %v426, 2
        %v428 = vadd.f32 %v426, %v427
        %v429 = vrot.slane %v428, 1
        %v430 = vadd.f32 %v428, %v429
        %v431 = vrcp.pop 16.0
        %v432 = vmul.f32 %v430, %v431
        %v433 = vsub.f32 %v418, %v432
        %v434 = vsub.f32 %v421, %v432
        %v435 = vmul.f32 %v433, %v433
        %v436 = vmul.f32 %v434, %v434
        %v437 = vadd.f32 %v435, %v436
        %v438 = vrot.slane %v437, 4
        %v439 = vadd.f32 %v437, %v438
        %v440 = vrot.slane %v439, 2
        %v441 = vadd.f32 %v439, %v440
        %v442 = vrot.slane %v441, 1
        %v443 = vadd.f32 %v441, %v442
        %v444 = vmul.f32 %v443, %v431
        %v445 = vld [vmem:[%s209 + $0x1] sm:$0x1]
        %v446 = vadd.f32 %v444, 1e-05
        %v447 = vrsqrt.pop %v446
        %v448 = vmul.f32 %v445, %v447
        %v449 = vlaneseq
        %v450 = vshrl.u32 %v449, 7
        %v451 = vsub.s32 0, %v450
        %v452 = vrot.slane %v448, %v451
        %v453 = vmul.f32 %v433, %v452
        %v454 = vmul.f32 %v434, %v452
        %v455 = vld [vmem:[%s209 + $0x2] sm:$0x1]
        %v456 = vlaneseq
        %v457 = vshrl.u32 %v456, 7
        %v458 = vsub.s32 0, %v457
        %v459 = vrot.slane %v455, %v458
        %v460 = vadd.f32 %v453, %v459
        %v461 = vadd.f32 %v454, %v459
        %vm462 = vcmp.ge.f32.partialorder %v460, 0.0
        %vm463 = vcmp.ge.f32.partialorder %v461, 0.0
        %v464 = vld [vmem:[%s209 + $0x3] sm:$0x1]
        %v465 = vlaneseq
        %v466 = vshrl.u32 %v465, 7
        %v467 = vsub.s32 0, %v466
        %v468 = vrot.slane %v464, %v467
        %v469 = vmul.f32 %v468, %v460
        %v470 = vmul.f32 %v468, %v461
        %v471 = vsel %vm462, %v460, %v469
        %v472 = vsel %vm463, %v461, %v470
        %v473 = vpack.c.bf16 %v472, %v471
        %v475 = vunpack.c.l.b16 %v473
        %v476 = vunpack.c.h.b16 %v473
        %v477 = vpack.c.b16 %v475, %v475
        %v478 = vpack.c.b16 %v476, %v476
        %481 = vst [vmem:[%s236] sm:$0xf] %v477
        %482 = vst [vmem:[%s236 + $0x4] sm:$0xf] %v478
        %s483 = sand.u32 %s102, 1
        %s484 = scalar_lea.sflag [#allocation4], %s483
        %s485 = sand.u32 %s102, 1
        %s486 = smul.addr %s485, 8
        %s487 = scalar_lea.vmem [#allocation8], %s486
        // Predicated region
        $region45: #{tpu_custom_call.1} parent=31 // pred_check
          %p488 = pneg %p112
        $region46: #{tpu_custom_call.1} parent=31 // pred_check_branch
          %490 = sbr.rel (%p488) target = $region48
        $region47: #{tpu_custom_call.1} parent=31 // pred_region
          %s492 = ssub.s32 128, 128
          %493 = vsyncadd %s484, %s492
          %s494 = smul.addr %s21, 64
          %s495 = scalar_lea.hbm %s3, %s494
          %s496 = sshll.u32 %s487, 4
          %s497 = int_to_ptr.vmem [resolvable:$true] %s496
          %502 = dma.vmem_to_hbm [thread:$0]  %s497, 128, %s495, %s484, 64, 128, 4
        $region48: #{tpu_custom_call.1} parent=31 // pred_fallthru
          _
      $region32: #{tpu_custom_call.1} parent=5 // pred_fallthru
        _
      %p503 = scmp.le.s32.totalorder 2, %s16
      // Predicated region
      $region49: #{tpu_custom_call.1} parent=5 // pred_check
        %p504 = pneg %p503
      $region50: #{tpu_custom_call.1} parent=5 // pred_check_branch
        %506 = sbr.rel (%p504) target = $region52
      $region51: #{tpu_custom_call.1} parent=5 // pred_region
        %s507 = ssub.s32 %s16, 2
        // Predicated region
        $region53: #{tpu_custom_call.1} parent=51 // pred_check
          %p508 = pneg %p118
        $region54: #{tpu_custom_call.1} parent=51 // pred_check_branch
          %510 = sbr.rel (%p508) target = $region56
        $region55: #{tpu_custom_call.1} parent=51 // pred_region
          %s511 = sand.u32 %s103, 1
          %s512 = scalar_lea.sflag [#allocation4], %s511
          %s513 = sand.u32 %s103, 1
          %s514 = smul.addr %s513, 8
          %s515 = scalar_lea.vmem [#allocation8], %s514
          %516 = dma.done %s512, 128
        $region56: #{tpu_custom_call.1} parent=51 // pred_fallthru
          _
      $region52: #{tpu_custom_call.1} parent=5 // pred_fallthru
        _
    $region6: #{tpu_custom_call.1} parent=1 // loop_footer
      %s20 = sadd.s32 1, %s16
    $region7: #{tpu_custom_call.1} parent=1 // loop_footer_branch
      %15 = sbr.rel target = $region3
    $region8: #{tpu_custom_call.1} parent=1 // loop_exit
      _
    %517 = vsyncpa [#allocation3], 1
    %s518 = scalar_lea.sflag [#allocation3], 1
    %519 = vsyncpa %s518, 1
    %520 = vsyncpa [#allocation6], 1
    %s521 = scalar_lea.sflag [#allocation6], 1
    %522 = vsyncpa %s521, 1
    %523 = vsyncpa [#allocation4], 1
    %s524 = scalar_lea.sflag [#allocation4], 1
    %525 = vsyncpa %s524, 1

</llo_original>
